<compile_context>
chip_gen: v7x
topology: tpu7x:2x2x1
jax: 0.10.0
libtpu: 0.0.40
codegen_flags: <defaults>
</compile_context>

<pallas_src>
import jax
import jax.numpy as jnp
from jax.experimental import pallas as pl
from jax.experimental.pallas import tpu as pltpu


def se_kernel(x_ref, p_ref, o_ref):
    x = x_ref[...].astype(jnp.float32)           # (Nb, C, HW), HW in lanes
    C = x.shape[1]

    p = p_ref[...]                               # (2C+2, C) packed params
    w1t = p[:C, :]                               # (C, C)  W1^T, hidden padded to C
    w2t = p[C:2 * C, :]                          # (C, C)  W2^T, padded rows are 0
    b1 = p[2 * C, :]                             # (C,)    padded entries are 0
    b2 = p[2 * C + 1, :]                         # (C,)

    # Squeeze: lane-axis reduction (XLU) -> (Nb, C).
    pooled = jnp.mean(x, axis=-1)

    # Excitation: two tiny MXU matmuls, f32 accumulation.
    h = jnp.dot(pooled, w1t, preferred_element_type=jnp.float32) + b1
    h = jnp.maximum(h, 0.0)                      # padded cols stay exactly 0
    s = jnp.dot(h, w2t, preferred_element_type=jnp.float32) + b2
    s = jax.nn.sigmoid(s)                        # (Nb, C)

    # Scale: lane-broadcast multiply, lane-dense unmasked store.
    o_ref[...] = (x * s[:, :, None]).astype(o_ref.dtype)


def _pick_batch_tile(N, per_n_bytes, target_bytes=2 << 20):
    """Largest divisor of N whose input block is ~<= 2 MiB. With in+out both
    double-buffered that is <= ~8 MiB of VMEM, safe on v5e/v6e/v7x defaults."""
    nb = max(1, min(N, target_bytes // max(per_n_bytes, 1)))
    while N % nb != 0:
        nb -= 1
    return nb


def squeeze_excitation_c64(x_nchw, w1, b1, w2, b2):
    """x_nchw: (N, C, H, W); w1: (C//16, C, 1, 1); b1: (C//16,);
    w2: (C, C//16, 1, 1); b2: (C,). Returns (N, C, H, W)."""
    N, C, H, W = x_nchw.shape
    C16 = C // 16
    HW = H * W

    # Free reshape: NCHW -> (N, C, HW); HW becomes the lane axis.
    x = x_nchw.reshape(N, C, HW)

    # Pack parameters into a single tile; pad hidden dim C16 -> C with zeros.
    w1t_pad = jnp.zeros((C, C), jnp.float32).at[:, :C16].set(
        w1.reshape(C16, C).T.astype(jnp.float32))          # (C, C)
    w2t_pad = jnp.zeros((C, C), jnp.float32).at[:C16, :].set(
        w2.reshape(C, C16).T.astype(jnp.float32))          # (C, C)
    b1_pad = jnp.zeros((C,), jnp.float32).at[:C16].set(b1.astype(jnp.float32))
    b2_row = b2.astype(jnp.float32)
    params = jnp.concatenate(
        [w1t_pad, w2t_pad, b1_pad[None, :], b2_row[None, :]], axis=0)  # (2C+2, C)

    nb = _pick_batch_tile(N, per_n_bytes=C * HW * x.dtype.itemsize)
    grid = (N // nb,)

    out = pl.pallas_call(
        se_kernel,
        out_shape=jax.ShapeDtypeStruct((N, C, HW), x.dtype),
        grid_spec=pltpu.PrefetchScalarGridSpec(
            num_scalar_prefetch=0,
            grid=grid,
            in_specs=[
                pl.BlockSpec((nb, C, HW), lambda i: (i, 0, 0)),
                pl.BlockSpec((2 * C + 2, C), lambda i: (0, 0)),
            ],
            out_specs=pl.BlockSpec((nb, C, HW), lambda i: (i, 0, 0)),
        ),
        compiler_params=pltpu.CompilerParams(
            dimension_semantics=("parallel",)),
    )(x, params)

    # Free reshape back to NCHW.
    return out.reshape(N, C, H, W)


def _reference(x_nchw, w1, b1, w2, b2):
    """Pure-JAX reference matching the PyTorch forward."""
    C = x_nchw.shape[1]
    C16 = C // 16
    pooled = jnp.mean(x_nchw, axis=(2, 3))                  # (N, C)
    h = pooled @ w1.reshape(C16, C).T + b1                  # (N, C16)
    h = jnp.maximum(h, 0.0)
    s = h @ w2.reshape(C, C16).T + b2                       # (N, C)
    s = jax.nn.sigmoid(s)
    return x_nchw * s[:, :, None, None]


if __name__ == "__main__":
    N, C, H, W = 2, 64, 16, 16
    C16 = C // 16

    key = jax.random.PRNGKey(0)
    kx, k1, k2, k3, k4 = jax.random.split(key, 5)

    x = jax.random.normal(kx, (N, C, H, W), dtype=jnp.float32)
    # Conv2d 1x1 weight shapes: (out, in, 1, 1).
    w1 = 0.1 * jax.random.normal(k1, (C16, C, 1, 1), dtype=jnp.float32)
    b1 = 0.1 * jax.random.normal(k2, (C16,), dtype=jnp.float32)
    w2 = 0.1 * jax.random.normal(k3, (C, C16, 1, 1), dtype=jnp.float32)
    b2 = 0.1 * jax.random.normal(k4, (C,), dtype=jnp.float32)

    out = squeeze_excitation_c64(x, w1, b1, w2, b2)
    out = jax.block_until_ready(out)

    ref = _reference(x, w1, b1, w2, b2)
    assert out.shape == (N, C, H, W)
    assert jnp.allclose(out, ref, atol=1e-5, rtol=1e-5), "mismatch vs reference"

    print("KERNEL_OK")
</pallas_src>

<mosaic_0001>
module attributes {stable_mosaic.version = 11 : i64} {
  func.func @se_kernel(%arg0: i32, %arg1: memref<2x64x256xf32, #tpu.memory_space<vmem>>, %arg2: memref<130x64xf32, #tpu.memory_space<vmem>>, %arg3: memref<2x64x256xf32, #tpu.memory_space<vmem>>) attributes {dimension_semantics = [#tpu.dimension_semantics<parallel>], iteration_bounds = array<i64: 1>, scalar_prefetch = 0 : i64, scratch_operands = 0 : i64, tpu.core_type = #tpu.core_type<tc>, window_params = [{transform_indices = @transform_0, window_bounds = array<i64: 2, 64, 256>}, {pipeline_mode = #tpu.pipeline_mode<synchronous>, transform_indices = @transform_1, window_bounds = array<i64: 130, 64>}, {transform_indices = @transform_2, window_bounds = array<i64: 2, 64, 256>}]} {
    %c0 = arith.constant 0 : index
    %c0_0 = arith.constant 0 : index
    %c0_1 = arith.constant 0 : index
    %0 = vector.load %arg1[%c0, %c0_0, %c0_1] : memref<2x64x256xf32, #tpu.memory_space<vmem>>, vector<2x64x256xf32>
    %c0_2 = arith.constant 0 : index
    %c0_3 = arith.constant 0 : index
    %1 = vector.load %arg2[%c0_2, %c0_3] : memref<130x64xf32, #tpu.memory_space<vmem>>, vector<130x64xf32>
    %2 = vector.extract_strided_slice %1 {offsets = [0, 0], sizes = [64, 64], strides = [1, 1]} : vector<130x64xf32> to vector<64x64xf32>
    %3 = vector.extract_strided_slice %1 {offsets = [64, 0], sizes = [64, 64], strides = [1, 1]} : vector<130x64xf32> to vector<64x64xf32>
    %4 = vector.extract_strided_slice %1 {offsets = [128, 0], sizes = [1, 64], strides = [1, 1]} : vector<130x64xf32> to vector<1x64xf32>
    %5 = vector.shape_cast %4 : vector<1x64xf32> to vector<64xf32>
    %6 = vector.extract_strided_slice %1 {offsets = [129, 0], sizes = [1, 64], strides = [1, 1]} : vector<130x64xf32> to vector<1x64xf32>
    %7 = vector.shape_cast %6 : vector<1x64xf32> to vector<64xf32>
    %cst = arith.constant dense<0.000000e+00> : vector<2x64xf32>
    %8 = vector.multi_reduction <add>, %0, %cst [2] : vector<2x64x256xf32> to vector<2x64xf32>
    %cst_4 = arith.constant 2.560000e+02 : f32
    %9 = vector.broadcast %cst_4 : f32 to vector<2x64xf32>
    %10 = arith.divf %8, %9 : vector<2x64xf32>
    %cst_5 = arith.constant dense<0.000000e+00> : vector<2x64xf32>
    %11 = tpu.matmul %10, %2, %cst_5 {dimension_numbers = #tpu.dot_dimension_numbers<[1], [0], [0], [1], [0, 0, 1, 1], [], []>} : vector<2x64xf32>, vector<64x64xf32>, vector<2x64xf32> -> vector<2x64xf32>
    %12 = vector.shape_cast %5 : vector<64xf32> to vector<1x64xf32>
    %13 = vector.broadcast %12 : vector<1x64xf32> to vector<2x64xf32>
    %14 = arith.addf %11, %13 : vector<2x64xf32>
    %cst_6 = arith.constant 0.000000e+00 : f32
    %15 = vector.broadcast %cst_6 : f32 to vector<2x64xf32>
    %16 = arith.maximumf %14, %15 : vector<2x64xf32>
    %cst_7 = arith.constant dense<0.000000e+00> : vector<2x64xf32>
    %17 = tpu.matmul %16, %3, %cst_7 {dimension_numbers = #tpu.dot_dimension_numbers<[1], [0], [0], [1], [0, 0, 1, 1], [], []>} : vector<2x64xf32>, vector<64x64xf32>, vector<2x64xf32> -> vector<2x64xf32>
    %18 = vector.shape_cast %7 : vector<64xf32> to vector<1x64xf32>
    %19 = vector.broadcast %18 : vector<1x64xf32> to vector<2x64xf32>
    %20 = arith.addf %17, %19 : vector<2x64xf32>
    %21 = arith.negf %20 : vector<2x64xf32>
    %22 = math.exp %21 : vector<2x64xf32>
    %cst_8 = arith.constant 1.000000e+00 : f32
    %23 = vector.broadcast %cst_8 : f32 to vector<2x64xf32>
    %24 = arith.addf %23, %22 : vector<2x64xf32>
    %25 = arith.divf %23, %24 : vector<2x64xf32>
    %26 = vector.shape_cast %25 : vector<2x64xf32> to vector<2x64x1xf32>
    %27 = vector.broadcast %26 : vector<2x64x1xf32> to vector<2x64x256xf32>
    %28 = arith.mulf %0, %27 : vector<2x64x256xf32>
    %c0_9 = arith.constant 0 : index
    %c0_10 = arith.constant 0 : index
    %c0_11 = arith.constant 0 : index
    %29 = vector.load %arg3[%c0_9, %c0_10, %c0_11] : memref<2x64x256xf32, #tpu.memory_space<vmem>>, vector<2x64x256xf32>
    tpu.vector_store %arg3[%c0_9, %c0_10, %c0_11], %28 {strides = array<i32>} : memref<2x64x256xf32, #tpu.memory_space<vmem>>, vector<2x64x256xf32>,
    return
  }
  func.func @transform_0(%arg0: i32) -> (i32, i32, i32) {
    %c0_i32 = arith.constant 0 : i32
    %c0_i32_0 = arith.constant 0 : i32
    %c0_i32_1 = arith.constant 0 : i32
    return %arg0, %c0_i32, %c0_i32_0 : i32, i32, i32
  }
  func.func @transform_1(%arg0: i32) -> (i32, i32) {
    %c0_i32 = arith.constant 0 : i32
    %c0_i32_0 = arith.constant 0 : i32
    %c0_i32_1 = arith.constant 0 : i32
    return %c0_i32, %c0_i32_0 : i32, i32
  }
  func.func @transform_2(%arg0: i32) -> (i32, i32, i32) {
    %c0_i32 = arith.constant 0 : i32
    %c0_i32_0 = arith.constant 0 : i32
    %c0_i32_1 = arith.constant 0 : i32
    return %arg0, %c0_i32, %c0_i32_0 : i32, i32, i32
  }
}

</mosaic_0001>

<llo_original>
// kernel: tpu_custom_call.1
$region0: #{tpu_custom_call.1}
  #allocation0 [shape = 'u32[]', space=smem, size = 0x4, offset = 0x4, fixed_abs, tag = 'smem constant byte address 0x4 - core index']
  #allocation1 [shape = 'u32[144,128]{1,0:T(1,128)}', space=vmem, size = 0x12000, scoped, tag = 'internal scratch']
  %s0 = inlined_call_operand.vmem [shape: f32[2,64,256], index: 0, kind: input, shape index: {}]
  %s1 = inlined_call_operand.vmem [shape: f32[130,64], index: 1, kind: input, shape index: {}]
  %s2 = inlined_call_operand.hbm [shape: f32[2,64,256], index: 2, kind: output, shape index: {}]
  %s3 = sld [smem:[#allocation0]]
  $region18: #{tpu_custom_call.1} parent=0
    _
  %s5 = ssub.s32 1, %s3
  %s6 = scalar_select 0, %s5, %s3
  $region1: #{tpu_custom_call.1} parent=0
    #allocation2 [shape = 'u8[131072]{0}', space=vmem, size = 0x20000, scoped, tag = 'output window, operand 0, single buffered']
    #allocation3 [shape = 's32[1]{0}', space=sflag, size = 0x4, scoped, tag = 'scoped memory for tpu_custom_call.1']
    %7 = vsyncpa [#allocation3], 0
    // Predicated region
    $region2: #{tpu_custom_call.1} parent=1 // pred_check
      _
    $region3: #{tpu_custom_call.1} parent=1 // pred_check_branch
      %9 = sbr.rel (0) target = $region5
    $region4: #{tpu_custom_call.1} parent=1 // pred_region
      _
    $region5: #{tpu_custom_call.1} parent=1 // pred_fallthru
      _
    // Predicated region
    $region6: #{tpu_custom_call.1} parent=1 // pred_check
      _
    $region7: #{tpu_custom_call.1} parent=1 // pred_check_branch
      %11 = sbr.rel (0) target = $region9
    $region8: #{tpu_custom_call.1} parent=1 // pred_region
      _
    $region9: #{tpu_custom_call.1} parent=1 // pred_fallthru
      _
    %v12 = vld [vmem:[%s0] sm:$0xff]
    %v13 = vld [vmem:[%s0 + $0x8] sm:$0xff]
    %v14 = vld [vmem:[%s0 + $0x10] sm:$0xff]
    %v15 = vld [vmem:[%s0 + $0x18] sm:$0xff]
    %v16 = vld [vmem:[%s0 + $0x20] sm:$0xff]
    %v17 = vld [vmem:[%s0 + $0x28] sm:$0xff]
    %v18 = vld [vmem:[%s0 + $0x30] sm:$0xff]
    %v19 = vld [vmem:[%s0 + $0x38] sm:$0xff]
    %v20 = vld [vmem:[%s0 + $0x40] sm:$0xff]
    %v21 = vld [vmem:[%s0 + $0x48] sm:$0xff]
    %v22 = vld [vmem:[%s0 + $0x50] sm:$0xff]
    %v23 = vld [vmem:[%s0 + $0x58] sm:$0xff]
    %v24 = vld [vmem:[%s0 + $0x60] sm:$0xff]
    %v25 = vld [vmem:[%s0 + $0x68] sm:$0xff]
    %v26 = vld [vmem:[%s0 + $0x70] sm:$0xff]
    %v27 = vld [vmem:[%s0 + $0x78] sm:$0xff]
    %v28 = vld [vmem:[%s0 + $0x80] sm:$0xff]
    %v29 = vld [vmem:[%s0 + $0x88] sm:$0xff]
    %v30 = vld [vmem:[%s0 + $0x90] sm:$0xff]
    %v31 = vld [vmem:[%s0 + $0x98] sm:$0xff]
    %v32 = vld [vmem:[%s0 + $0xa0] sm:$0xff]
    %v33 = vld [vmem:[%s0 + $0xa8] sm:$0xff]
    %v34 = vld [vmem:[%s0 + $0xb0] sm:$0xff]
    %v35 = vld [vmem:[%s0 + $0xb8] sm:$0xff]
    %v36 = vld [vmem:[%s0 + $0xc0] sm:$0xff]
    %v37 = vld [vmem:[%s0 + $0xc8] sm:$0xff]
    %v38 = vld [vmem:[%s0 + $0xd0] sm:$0xff]
    %v39 = vld [vmem:[%s0 + $0xd8] sm:$0xff]
    %v40 = vld [vmem:[%s0 + $0xe0] sm:$0xff]
    %v41 = vld [vmem:[%s0 + $0xe8] sm:$0xff]
    %v42 = vld [vmem:[%s0 + $0xf0] sm:$0xff]
    %v43 = vld [vmem:[%s0 + $0xf8] sm:$0xff]
    %v44 = vld [vmem:[%s1] sm:$0xff]
    %v45 = vld [vmem:[%s1 + $0x8] sm:$0xff]
    %v46 = vld [vmem:[%s1 + $0x10] sm:$0xff]
    %v47 = vld [vmem:[%s1 + $0x18] sm:$0xff]
    %v48 = vld [vmem:[%s1 + $0x20] sm:$0xff]
    %v49 = vld [vmem:[%s1 + $0x28] sm:$0xff]
    %v50 = vld [vmem:[%s1 + $0x30] sm:$0xff]
    %v51 = vld [vmem:[%s1 + $0x38] sm:$0xff]
    %v52 = vld [vmem:[%s1 + $0x40] sm:$0xff]
    %v53 = vld [vmem:[%s1 + $0x48] sm:$0xff]
    %v54 = vld [vmem:[%s1 + $0x50] sm:$0xff]
    %v55 = vld [vmem:[%s1 + $0x58] sm:$0xff]
    %v56 = vld [vmem:[%s1 + $0x60] sm:$0xff]
    %v57 = vld [vmem:[%s1 + $0x68] sm:$0xff]
    %v58 = vld [vmem:[%s1 + $0x70] sm:$0xff]
    %v59 = vld [vmem:[%s1 + $0x78] sm:$0xff]
    %v60 = vld [vmem:[%s1 + $0x80] sm:$0x3]
    %v61 = vadd.f32 %v12, %v13
    %62 = vadd.xlane.f32.xlu0 %v61
    %v63 = vpop.xlane.xlu0 %62
    %v64 = vadd.f32 %v14, %v15
    %65 = vadd.xlane.f32.xlu0 %v64
    %v66 = vpop.xlane.xlu0 %65
    %v67 = vadd.f32 %v16, %v17
    %68 = vadd.xlane.f32.xlu0 %v67
    %v69 = vpop.xlane.xlu0 %68
    %v70 = vadd.f32 %v18, %v19
    %71 = vadd.xlane.f32.xlu0 %v70
    %v72 = vpop.xlane.xlu0 %71
    %v73 = vadd.f32 %v20, %v21
    %74 = vadd.xlane.f32.xlu0 %v73
    %v75 = vpop.xlane.xlu0 %74
    %v76 = vadd.f32 %v22, %v23
    %77 = vadd.xlane.f32.xlu0 %v76
    %v78 = vpop.xlane.xlu0 %77
    %v79 = vadd.f32 %v24, %v25
    %80 = vadd.xlane.f32.xlu0 %v79
    %v81 = vpop.xlane.xlu0 %80
    %v82 = vadd.f32 %v26, %v27
    %83 = vadd.xlane.f32.xlu0 %v82
    %v84 = vpop.xlane.xlu0 %83
    %v85 = vadd.f32 %v28, %v29
    %86 = vadd.xlane.f32.xlu0 %v85
    %v87 = vpop.xlane.xlu0 %86
    %v88 = vadd.f32 %v30, %v31
    %89 = vadd.xlane.f32.xlu0 %v88
    %v90 = vpop.xlane.xlu0 %89
    %v91 = vadd.f32 %v32, %v33
    %92 = vadd.xlane.f32.xlu0 %v91
    %v93 = vpop.xlane.xlu0 %92
    %v94 = vadd.f32 %v34, %v35
    %95 = vadd.xlane.f32.xlu0 %v94
    %v96 = vpop.xlane.xlu0 %95
    %v97 = vadd.f32 %v36, %v37
    %98 = vadd.xlane.f32.xlu0 %v97
    %v99 = vpop.xlane.xlu0 %98
    %v100 = vadd.f32 %v38, %v39
    %101 = vadd.xlane.f32.xlu0 %v100
    %v102 = vpop.xlane.xlu0 %101
    %v103 = vadd.f32 %v40, %v41
    %104 = vadd.xlane.f32.xlu0 %v103
    %v105 = vpop.xlane.xlu0 %104
    %v106 = vadd.f32 %v42, %v43
    %107 = vadd.xlane.f32.xlu0 %v106
    %v108 = vpop.xlane.xlu0 %107
    %v109 = vrcp.pop 256.0
    %v110 = vmul.f32 %v63, %v109
    %v111 = vmul.f32 %v66, %v109
    %v112 = vmul.f32 %v69, %v109
    %v113 = vmul.f32 %v72, %v109
    %v114 = vmul.f32 %v75, %v109
    %v115 = vmul.f32 %v78, %v109
    %v116 = vmul.f32 %v81, %v109
    %v117 = vmul.f32 %v84, %v109
    %v118 = vmul.f32 %v87, %v109
    %v119 = vmul.f32 %v90, %v109
    %v120 = vmul.f32 %v93, %v109
    %v121 = vmul.f32 %v96, %v109
    %v122 = vmul.f32 %v99, %v109
    %v123 = vmul.f32 %v102, %v109
    %v124 = vmul.f32 %v105, %v109
    %v125 = vmul.f32 %v108, %v109
    %v126 = vlaneseq
    %v127 = vshrl.u32 %v126, 7
    %v128 = vsub.s32 0, %v127
    %v129 = vrot.slane %v60, %v128
    %v146 = vlaneseq
    %v147 = vand.u32 %v146, 127
    %v148 = vlaneseq
    %v149 = vshrl.u32 %v148, 7
    %v150 = vsub.s32 %v147, %v149
    %v151 = vrot.slane %v110, %v150
    %v152 = vadd.s32 %v147, 4294967288
    %v153 = vlaneseq
    %v154 = vshrl.u32 %v153, 7
    %v155 = vsub.s32 %v152, %v154
    %v156 = vrot.slane %v111, %v155
    %vm157 = vcmask 130112
    %v158 = vsel %vm157, %v156, %v151
    %v159 = vadd.s32 %v147, 4294967280
    %v160 = vlaneseq
    %v161 = vshrl.u32 %v160, 7
    %v162 = vsub.s32 %v159, %v161
    %v163 = vrot.slane %v112, %v162
    %vm164 = vcmask 195712
    %v165 = vsel %vm164, %v163, %v158
    %v166 = vadd.s32 %v147, 4294967272
    %v167 = vlaneseq
    %v168 = vshrl.u32 %v167, 7
    %v169 = vsub.s32 %v166, %v168
    %v170 = vrot.slane %v113, %v169
    %vm171 = vcmask 261312
    %v172 = vsel %vm171, %v170, %v165
    %v173 = vadd.s32 %v147, 4294967264
    %v174 = vlaneseq
    %v175 = vshrl.u32 %v174, 7
    %v176 = vsub.s32 %v173, %v175
    %v177 = vrot.slane %v114, %v176
    %vm178 = vcmask 326912
    %v179 = vsel %vm178, %v177, %v172
    %v180 = vadd.s32 %v147, 4294967256
    %v181 = vlaneseq
    %v182 = vshrl.u32 %v181, 7
    %v183 = vsub.s32 %v180, %v182
    %v184 = vrot.slane %v115, %v183
    %vm185 = vcmask 392512
    %v186 = vsel %vm185, %v184, %v179
    %v187 = vadd.s32 %v147, 4294967248
    %v188 = vlaneseq
    %v189 = vshrl.u32 %v188, 7
    %v190 = vsub.s32 %v187, %v189
    %v191 = vrot.slane %v116, %v190
    %vm192 = vcmask 458112
    %v193 = vsel %vm192, %v191, %v186
    %v194 = vadd.s32 %v147, 4294967240
    %v195 = vlaneseq
    %v196 = vshrl.u32 %v195, 7
    %v197 = vsub.s32 %v194, %v196
    %v198 = vrot.slane %v117, %v197
    %vm199 = vcmask 523712
    %v200 = vsel %vm199, %v198, %v193
    %v201 = vlaneseq
    %v202 = vshrl.u32 %v201, 7
    %v203 = vsub.s32 %v147, %v202
    %v204 = vrot.slane %v118, %v203
    %v205 = vlaneseq
    %v206 = vshrl.u32 %v205, 7
    %v207 = vsub.s32 %v152, %v206
    %v208 = vrot.slane %v119, %v207
    %v209 = vsel %vm157, %v208, %v204
    %v210 = vlaneseq
    %v211 = vshrl.u32 %v210, 7
    %v212 = vsub.s32 %v159, %v211
    %v213 = vrot.slane %v120, %v212
    %v214 = vsel %vm164, %v213, %v209
    %v215 = vlaneseq
    %v216 = vshrl.u32 %v215, 7
    %v217 = vsub.s32 %v166, %v216
    %v218 = vrot.slane %v121, %v217
    %v219 = vsel %vm171, %v218, %v214
    %v220 = vlaneseq
    %v221 = vshrl.u32 %v220, 7
    %v222 = vsub.s32 %v173, %v221
    %v223 = vrot.slane %v122, %v222
    %v224 = vsel %vm178, %v223, %v219
    %v225 = vlaneseq
    %v226 = vshrl.u32 %v225, 7
    %v227 = vsub.s32 %v180, %v226
    %v228 = vrot.slane %v123, %v227
    %v229 = vsel %vm185, %v228, %v224
    %v230 = vlaneseq
    %v231 = vshrl.u32 %v230, 7
    %v232 = vsub.s32 %v187, %v231
    %v233 = vrot.slane %v124, %v232
    %v234 = vsel %vm192, %v233, %v229
    %v235 = vlaneseq
    %v236 = vshrl.u32 %v235, 7
    %v237 = vsub.s32 %v194, %v236
    %v238 = vrot.slane %v125, %v237
    %v239 = vsel %vm199, %v238, %v234
    %vm240 = vcmask 1041409
    %v241 = vsel %vm240, %v239, %v200
    %vm242 = vcmask 523264
    %v243 = vsel %vm242, %v241, 0
    %245 = vmatprep.subr.mxu0 0.0
    %246 = vmatpush1.msra.mxu0 %v44
    %247 = vmatprep.subr.mxu0 0.0
    %248 = vmatpush1.msra.mxu0 %v45
    %249 = vmatprep.subr.mxu0 0.0
    %250 = vmatpush1.msra.mxu0 %v46
    %251 = vmatprep.subr.mxu0 0.0
    %252 = vmatpush1.msra.mxu0 %v47
    %253 = vmatprep.subr.mxu0 0.0
    %254 = vmatpush1.msra.mxu0 %v48
    %255 = vmatprep.subr.mxu0 0.0
    %256 = vmatpush1.msra.mxu0 %v49
    %257 = vmatprep.subr.mxu0 0.0
    %258 = vmatpush1.msra.mxu0 %v50
    %259 = vmatprep.subr.mxu0 0.0
    %260 = vmatpush1.msra.mxu0 %v51
    %261 = vmatprep.subr.mxu0 0.0
    %262 = vmatpush1.msra.mxu0 0.0
    %263 = vmatprep.subr.mxu0 0.0
    %264 = vmatpush1.msra.mxu0 0.0
    %265 = vmatprep.subr.mxu0 0.0
    %266 = vmatpush1.msra.mxu0 0.0
    %267 = vmatprep.subr.mxu0 0.0
    %268 = vmatpush1.msra.mxu0 0.0
    %269 = vmatprep.subr.mxu0 0.0
    %270 = vmatpush1.msra.mxu0 0.0
    %271 = vmatprep.subr.mxu0 0.0
    %272 = vmatpush1.msra.mxu0 0.0
    %273 = vmatprep.subr.mxu0 0.0
    %274 = vmatpush1.msra.mxu0 0.0
    %275 = vmatprep.subr.mxu0 0.0
    %276 = vmatpush1.msra.mxu0 0.0
    %277 = vmatprep.subr.mxu0 0.0
    %278 = vmatpush1.msra.mxu0 0.0
    %279 = vmatprep.subr.mxu0 0.0
    %280 = vmatpush1.msra.mxu0 0.0
    %281 = vmatprep.subr.mxu0 0.0
    %282 = vmatpush1.msra.mxu0 0.0
    %283 = vmatprep.subr.mxu0 0.0
    %284 = vmatpush1.msra.mxu0 0.0
    %285 = vmatprep.subr.mxu0 0.0
    %286 = vmatpush1.msra.mxu0 0.0
    %287 = vmatprep.subr.mxu0 0.0
    %288 = vmatpush1.msra.mxu0 0.0
    %289 = vmatprep.subr.mxu0 0.0
    %290 = vmatpush1.msra.mxu0 0.0
    %291 = vmatprep.subr.mxu0 0.0
    %292 = vmatpush1.msra.mxu0 0.0
    %293 = vmatprep.subr.mxu0 0.0
    %294 = vmatpush1.msra.mxu0 0.0
    %295 = vmatprep.subr.mxu0 0.0
    %296 = vmatpush1.msra.mxu0 0.0
    %297 = vmatprep.subr.mxu0 0.0
    %298 = vmatpush1.msra.mxu0 0.0
    %299 = vmatprep.subr.mxu0 0.0
    %300 = vmatpush1.msra.mxu0 0.0
    %301 = vmatprep.subr.mxu0 0.0
    %302 = vmatpush1.msra.mxu0 0.0
    %303 = vmatprep.subr.mxu0 0.0
    %304 = vmatpush1.msra.mxu0 0.0
    %305 = vmatprep.subr.mxu0 0.0
    %306 = vmatpush1.msra.mxu0 0.0
    %307 = vmatprep.subr.mxu0 0.0
    %308 = vmatpush1.msra.mxu0 0.0
    %309 = vmatprep.mubr.f32.mxu0 0.0
    %310 = vmatmul.mubr.f32.gmra.mrb[0].mxu0 %v243
    %v311 = vpop.f32.mrb[0].mxu0
    %v312 = vadd.f32 %v129, %v311
    %v313 = vpop.f32.mrb[0].mxu0
    %314 = vdwg.mxu0
    %v315 = vmax.f32 %v312, 0.0
    %v316 = vlaneseq
    %v317 = vshrl.u32 %v316, 7
    %v318 = vsub.s32 1, %v317
    %v319 = vrot.slane %v60, %v318
    %v321 = vsel %vm242, %v315, 0
    %323 = vmatprep.subr.mxu0 0.0
    %324 = vmatpush1.msra.mxu0 %v52
    %325 = vmatprep.subr.mxu0 0.0
    %326 = vmatpush1.msra.mxu0 %v53
    %327 = vmatprep.subr.mxu0 0.0
    %328 = vmatpush1.msra.mxu0 %v54
    %329 = vmatprep.subr.mxu0 0.0
    %330 = vmatpush1.msra.mxu0 %v55
    %331 = vmatprep.subr.mxu0 0.0
    %332 = vmatpush1.msra.mxu0 %v56
    %333 = vmatprep.subr.mxu0 0.0
    %334 = vmatpush1.msra.mxu0 %v57
    %335 = vmatprep.subr.mxu0 0.0
    %336 = vmatpush1.msra.mxu0 %v58
    %337 = vmatprep.subr.mxu0 0.0
    %338 = vmatpush1.msra.mxu0 %v59
    %339 = vmatprep.subr.mxu0 0.0
    %340 = vmatpush1.msra.mxu0 0.0
    %341 = vmatprep.subr.mxu0 0.0
    %342 = vmatpush1.msra.mxu0 0.0
    %343 = vmatprep.subr.mxu0 0.0
    %344 = vmatpush1.msra.mxu0 0.0
    %345 = vmatprep.subr.mxu0 0.0
    %346 = vmatpush1.msra.mxu0 0.0
    %347 = vmatprep.subr.mxu0 0.0
    %348 = vmatpush1.msra.mxu0 0.0
    %349 = vmatprep.subr.mxu0 0.0
    %350 = vmatpush1.msra.mxu0 0.0
    %351 = vmatprep.subr.mxu0 0.0
    %352 = vmatpush1.msra.mxu0 0.0
    %353 = vmatprep.subr.mxu0 0.0
    %354 = vmatpush1.msra.mxu0 0.0
    %355 = vmatprep.subr.mxu0 0.0
    %356 = vmatpush1.msra.mxu0 0.0
    %357 = vmatprep.subr.mxu0 0.0
    %358 = vmatpush1.msra.mxu0 0.0
    %359 = vmatprep.subr.mxu0 0.0
    %360 = vmatpush1.msra.mxu0 0.0
    %361 = vmatprep.subr.mxu0 0.0
    %362 = vmatpush1.msra.mxu0 0.0
    %363 = vmatprep.subr.mxu0 0.0
    %364 = vmatpush1.msra.mxu0 0.0
    %365 = vmatprep.subr.mxu0 0.0
    %366 = vmatpush1.msra.mxu0 0.0
    %367 = vmatprep.subr.mxu0 0.0
    %368 = vmatpush1.msra.mxu0 0.0
    %369 = vmatprep.subr.mxu0 0.0
    %370 = vmatpush1.msra.mxu0 0.0
    %371 = vmatprep.subr.mxu0 0.0
    %372 = vmatpush1.msra.mxu0 0.0
    %373 = vmatprep.subr.mxu0 0.0
    %374 = vmatpush1.msra.mxu0 0.0
    %375 = vmatprep.subr.mxu0 0.0
    %376 = vmatpush1.msra.mxu0 0.0
    %377 = vmatprep.subr.mxu0 0.0
    %378 = vmatpush1.msra.mxu0 0.0
    %379 = vmatprep.subr.mxu0 0.0
    %380 = vmatpush1.msra.mxu0 0.0
    %381 = vmatprep.subr.mxu0 0.0
    %382 = vmatpush1.msra.mxu0 0.0
    %383 = vmatprep.subr.mxu0 0.0
    %384 = vmatpush1.msra.mxu0 0.0
    %385 = vmatprep.subr.mxu0 0.0
    %386 = vmatpush1.msra.mxu0 0.0
    %387 = vmatprep.mubr.f32.mxu0 0.0
    %388 = vmatmul.mubr.f32.gmra.mrb[0].mxu0 %v321
    %v389 = vpop.f32.mrb[0].mxu0
    %v390 = vadd.f32 %v319, %v389
    %v391 = vpop.f32.mrb[0].mxu0
    %392 = vdwg.mxu0
    %v393 = vxor.u32 %v390, 2147483648
    %v394 = vmul.f32 %v393, 1.442695
    %v395 = vpow.pop %v394
    %v396 = vadd.f32 %v395, 1.0
    %v397 = vrcp.pop %v396
    %v398 = vmul.f32 1.0, %v397
    %v399 = vlaneseq
    %v400 = vshrl.u32 %v399, 7
    %v401 = vsub.s32 0, %v400
    %v402 = vrot.slane %v398, %v401
    %404 = vbcast.lane.b32.xlu0 %v402, 256
    %v405 = vpop.permute.xlu0 %404
    %s407 = sor.u32 256, 8
    %408 = vbcast.lane.b32.xlu0 %v402, %s407
    %v409 = vpop.permute.xlu0 %408
    %s411 = sor.u32 256, 16
    %412 = vbcast.lane.b32.xlu0 %v402, %s411
    %v413 = vpop.permute.xlu0 %412
    %s415 = sor.u32 256, 24
    %416 = vbcast.lane.b32.xlu0 %v402, %s415
    %v417 = vpop.permute.xlu0 %416
    %s419 = sor.u32 256, 32
    %420 = vbcast.lane.b32.xlu0 %v402, %s419
    %v421 = vpop.permute.xlu0 %420
    %s423 = sor.u32 256, 40
    %424 = vbcast.lane.b32.xlu0 %v402, %s423
    %v425 = vpop.permute.xlu0 %424
    %s427 = sor.u32 256, 48
    %428 = vbcast.lane.b32.xlu0 %v402, %s427
    %v429 = vpop.permute.xlu0 %428
    %s431 = sor.u32 256, 56
    %432 = vbcast.lane.b32.xlu0 %v402, %s431
    %v433 = vpop.permute.xlu0 %432
    %v434 = vlaneseq
    %v435 = vshrl.u32 %v434, 7
    %v436 = vsub.s32 1, %v435
    %v437 = vrot.slane %v398, %v436
    %439 = vbcast.lane.b32.xlu0 %v437, 256
    %v440 = vpop.permute.xlu0 %439
    %s442 = sor.u32 256, 8
    %443 = vbcast.lane.b32.xlu0 %v437, %s442
    %v444 = vpop.permute.xlu0 %443
    %s446 = sor.u32 256, 16
    %447 = vbcast.lane.b32.xlu0 %v437, %s446
    %v448 = vpop.permute.xlu0 %447
    %s450 = sor.u32 256, 24
    %451 = vbcast.lane.b32.xlu0 %v437, %s450
    %v452 = vpop.permute.xlu0 %451
    %s454 = sor.u32 256, 32
    %455 = vbcast.lane.b32.xlu0 %v437, %s454
    %v456 = vpop.permute.xlu0 %455
    %s458 = sor.u32 256, 40
    %459 = vbcast.lane.b32.xlu0 %v437, %s458
    %v460 = vpop.permute.xlu0 %459
    %s462 = sor.u32 256, 48
    %463 = vbcast.lane.b32.xlu0 %v437, %s462
    %v464 = vpop.permute.xlu0 %463
    %s466 = sor.u32 256, 56
    %467 = vbcast.lane.b32.xlu0 %v437, %s466
    %v468 = vpop.permute.xlu0 %467
    %v469 = vmul.f32 %v12, %v405
    %v470 = vmul.f32 %v13, %v405
    %v471 = vmul.f32 %v14, %v409
    %v472 = vmul.f32 %v15, %v409
    %v473 = vmul.f32 %v16, %v413
    %v474 = vmul.f32 %v17, %v413
    %v475 = vmul.f32 %v18, %v417
    %v476 = vmul.f32 %v19, %v417
    %v477 = vmul.f32 %v20, %v421
    %v478 = vmul.f32 %v21, %v421
    %v479 = vmul.f32 %v22, %v425
    %v480 = vmul.f32 %v23, %v425
    %v481 = vmul.f32 %v24, %v429
    %v482 = vmul.f32 %v25, %v429
    %v483 = vmul.f32 %v26, %v433
    %v484 = vmul.f32 %v27, %v433
    %v485 = vmul.f32 %v28, %v440
    %v486 = vmul.f32 %v29, %v440
    %v487 = vmul.f32 %v30, %v444
    %v488 = vmul.f32 %v31, %v444
    %v489 = vmul.f32 %v32, %v448
    %v490 = vmul.f32 %v33, %v448
    %v491 = vmul.f32 %v34, %v452
    %v492 = vmul.f32 %v35, %v452
    %v493 = vmul.f32 %v36, %v456
    %v494 = vmul.f32 %v37, %v456
    %v495 = vmul.f32 %v38, %v460
    %v496 = vmul.f32 %v39, %v460
    %v497 = vmul.f32 %v40, %v464
    %v498 = vmul.f32 %v41, %v464
    %v499 = vmul.f32 %v42, %v468
    %v500 = vmul.f32 %v43, %v468
    %501 = vst [vmem:[#allocation2] sm:$0xff] %v469
    %502 = vst [vmem:[#allocation2 + $0x8] sm:$0xff] %v470
    %503 = vst [vmem:[#allocation2 + $0x10] sm:$0xff] %v471
    %504 = vst [vmem:[#allocation2 + $0x18] sm:$0xff] %v472
    %505 = vst [vmem:[#allocation2 + $0x20] sm:$0xff] %v473
    %506 = vst [vmem:[#allocation2 + $0x28] sm:$0xff] %v474
    %507 = vst [vmem:[#allocation2 + $0x30] sm:$0xff] %v475
    %508 = vst [vmem:[#allocation2 + $0x38] sm:$0xff] %v476
    %509 = vst [vmem:[#allocation2 + $0x40] sm:$0xff] %v477
    %510 = vst [vmem:[#allocation2 + $0x48] sm:$0xff] %v478
    %511 = vst [vmem:[#allocation2 + $0x50] sm:$0xff] %v479
    %512 = vst [vmem:[#allocation2 + $0x58] sm:$0xff] %v480
    %513 = vst [vmem:[#allocation2 + $0x60] sm:$0xff] %v481
    %514 = vst [vmem:[#allocation2 + $0x68] sm:$0xff] %v482
    %515 = vst [vmem:[#allocation2 + $0x70] sm:$0xff] %v483
    %516 = vst [vmem:[#allocation2 + $0x78] sm:$0xff] %v484
    %517 = vst [vmem:[#allocation2 + $0x80] sm:$0xff] %v485
    %518 = vst [vmem:[#allocation2 + $0x88] sm:$0xff] %v486
    %519 = vst [vmem:[#allocation2 + $0x90] sm:$0xff] %v487
    %520 = vst [vmem:[#allocation2 + $0x98] sm:$0xff] %v488
    %521 = vst [vmem:[#allocation2 + $0xa0] sm:$0xff] %v489
    %522 = vst [vmem:[#allocation2 + $0xa8] sm:$0xff] %v490
    %523 = vst [vmem:[#allocation2 + $0xb0] sm:$0xff] %v491
    %524 = vst [vmem:[#allocation2 + $0xb8] sm:$0xff] %v492
    %525 = vst [vmem:[#allocation2 + $0xc0] sm:$0xff] %v493
    %526 = vst [vmem:[#allocation2 + $0xc8] sm:$0xff] %v494
    %527 = vst [vmem:[#allocation2 + $0xd0] sm:$0xff] %v495
    %528 = vst [vmem:[#allocation2 + $0xd8] sm:$0xff] %v496
    %529 = vst [vmem:[#allocation2 + $0xe0] sm:$0xff] %v497
    %530 = vst [vmem:[#allocation2 + $0xe8] sm:$0xff] %v498
    %531 = vst [vmem:[#allocation2 + $0xf0] sm:$0xff] %v499
    %532 = vst [vmem:[#allocation2 + $0xf8] sm:$0xff] %v500
    // Predicated region
    $region10: #{tpu_custom_call.1} parent=1 // pred_check
      _
    $region11: #{tpu_custom_call.1} parent=1 // pred_check_branch
      %534 = sbr.rel (0) target = $region13
    $region12: #{tpu_custom_call.1} parent=1 // pred_region
      %s536 = ssub.s32 4096, 4096
      %537 = vsyncadd [#allocation3], %s536
      %s538 = sshll.u32 [#allocation2], 4
      %s539 = int_to_ptr.vmem [resolvable:$true] %s538
      %544 = dma.vmem_to_hbm [thread:$0]  %s539, 4096, %s2, [#allocation3], 256, 256, 16
    $region13: #{tpu_custom_call.1} parent=1 // pred_fallthru
      _
    // Predicated region
    $region14: #{tpu_custom_call.1} parent=1 // pred_check
      _
    $region15: #{tpu_custom_call.1} parent=1 // pred_check_branch
      %546 = sbr.rel (0) target = $region17
    $region16: #{tpu_custom_call.1} parent=1 // pred_region
      %547 = dma.done [#allocation3], 4096
    $region17: #{tpu_custom_call.1} parent=1 // pred_fallthru
      _
    %548 = vsyncpa [#allocation3], 1

</llo_original>
